<compile_context>
chip_gen: v6e
topology: v6e:2x2x1
jax: 0.10.0
libtpu: 0.0.40
codegen_flags: <defaults>
</compile_context>

<pallas_src>
import math

import jax
import jax.numpy as jnp
from jax.experimental import pallas as pl
from jax.experimental.pallas import tpu as pltpu


# ---------------------------------------------------------------------------
# exact GELU: 0.5*x*(1+erf(x/sqrt(2))). erf via Abramowitz-Stegun 7.1.26
# (|err| <= 1.5e-7, i.e. ~f32 precision) using only Mosaic-supported ops.
# ---------------------------------------------------------------------------
def _erf(x):
    a1, a2, a3, a4, a5 = (0.254829592, -0.284496736, 1.421413741,
                          -1.453152027, 1.061405429)
    p = 0.3275911
    s = jnp.sign(x)
    ax = jnp.abs(x)
    t = 1.0 / (1.0 + p * ax)
    poly = ((((a5 * t + a4) * t + a3) * t + a2) * t + a1) * t
    return s * (1.0 - poly * jnp.exp(-ax * ax))


def _gelu_exact(x):
    return 0.5 * x * (1.0 + _erf(x * (1.0 / math.sqrt(2.0))))


def _r(n, m):
    return ((n + m - 1) // m) * m


def _pad_bytes(shape):
    """f32 VMEM footprint of `shape` with (8,128) sublane/lane padding."""
    s = list(shape)
    s[-1] = _r(s[-1], 128)
    if len(s) >= 2:
        s[-2] = _r(s[-2], 8)
    b = 4
    for d in s:
        b *= d
    return b


# ---------------------------------------------------------------------------
# Patch embedding kernel: u = x @ W_P + b_P + W_pos   (single invocation)
# ---------------------------------------------------------------------------
def _make_embed(BN, Q, P, D):
    def kernel(x_ref, wp_ref, bp_ref, wpos_ref, u_ref):
        x2 = x_ref[...].reshape(BN * Q, P)
        u = jnp.dot(x2, wp_ref[...], preferred_element_type=jnp.float32) + bp_ref[...]
        # W_pos shape (Q, 1): one scalar per patch position, broadcast over d_model.
        u_ref[...] = u.reshape(BN, Q, D) + wpos_ref[...].reshape(1, Q, 1)

    return pl.pallas_call(
        kernel, out_shape=jax.ShapeDtypeStruct((BN, Q, D), jnp.float32))


# ---------------------------------------------------------------------------
# Fused encoder: n_layers x TSTEncoderLayer in one pallas_call.
# Grid axis = layer index ("arbitrary"); out_ref is the layer-to-layer carry,
# residual-attention scores stay in one VMEM scratch.
# ---------------------------------------------------------------------------
def _make_fused_encoder(BN, Q, D, F, H, n_layers, C):
    dk = D // H
    HB = H * BN
    scale = float(dk) ** -0.5
    eps = 1e-5
    inv_n = 1.0 / float(BN * Q)

    def kernel(u_ref, wqkv_ref, wo_ref, w1_ref, w2_ref, vec_ref,
               out_ref, scores_sc):
        l = pl.program_id(0)

        # ---- layer 0: seed the resident carry with the patch embedding ----
        @pl.when(l == 0)
        def _init():
            out_ref[...] = u_ref[...]
            scores_sc[...] = jnp.zeros_like(scores_sc)      # prev=None for layer 0

        # packed per-layer vectors: [8, C]
        vec = vec_ref[0]
        b_qkv = vec[0:1, :3 * D]
        b_o = vec[1:2, :D]
        g1 = vec[2:3, :D]
        be1 = vec[3:4, :D]
        b1 = vec[4:5, :F]
        b2 = vec[5:6, :D]
        g2 = vec[6:7, :D]
        be2 = vec[7:8, :D]

        src = out_ref[...].reshape(BN * Q, D)                # carried activation (VMEM)

        # ---- fused QKV projection: one [BN*Q, D] x [D, 3D] MXU matmul ----
        qkv = jnp.dot(src, wqkv_ref[0], preferred_element_type=jnp.float32) + b_qkv
        qkv = qkv.reshape(BN, Q, 3 * D)

        # ---- split heads -> batched [H*BN, Q, dk] (slices + leading-axis stack) ----
        def split(base):
            parts = [qkv[:, :, base + h * dk: base + (h + 1) * dk] for h in range(H)]
            return jnp.stack(parts, axis=0).reshape(HB, Q, dk)

        qh = split(0)
        kh = split(D)
        vh = split(2 * D)

        # ---- all-head attention: ONE einsum for scores, ONE for p@v ----
        s = jnp.einsum('bqd,bkd->bqk', qh, kh,
                       preferred_element_type=jnp.float32) * scale
        s = s + scores_sc[...]                               # residual attention scores
        scores_sc[...] = s                                   # single carry write per layer
        m = jnp.max(s, axis=-1, keepdims=True)
        e = jnp.exp(s - m)
        p = e * pl.reciprocal(jnp.sum(e, axis=-1, keepdims=True), approx=True)
        o = jnp.einsum('bqk,bkd->bqd', p, vh,
                       preferred_element_type=jnp.float32)   # [HB, Q, dk]

        # ---- merge heads (lane concat) + single K=D output projection ----
        o = o.reshape(H, BN, Q, dk)
        o2 = jnp.concatenate([o[h] for h in range(H)], axis=-1).reshape(BN * Q, D)
        src2 = jnp.dot(o2, wo_ref[0], preferred_element_type=jnp.float32) + b_o

        # ---- residual + BatchNorm1d(d_model): one-pass batch stats, fused affine ----
        xr = src + src2
        mean1 = jnp.sum(xr, axis=0, keepdims=True) * inv_n
        msq1 = jnp.sum(xr * xr, axis=0, keepdims=True) * inv_n
        var1 = msq1 - mean1 * mean1                          # biased variance (train mode)
        mult1 = g1 * jax.lax.rsqrt(var1 + eps)
        xn = xr * mult1 + (be1 - mean1 * mult1)

        # ---- FFN: Linear(D,F) -> exact GELU -> Linear(F,D) ----
        h1 = _gelu_exact(jnp.dot(xn, w1_ref[0], preferred_element_type=jnp.float32) + b1)
        ff = jnp.dot(h1, w2_ref[0], preferred_element_type=jnp.float32) + b2

        yr = xn + ff
        mean2 = jnp.sum(yr, axis=0, keepdims=True) * inv_n
        msq2 = jnp.sum(yr * yr, axis=0, keepdims=True) * inv_n
        var2 = msq2 - mean2 * mean2
        mult2 = g2 * jax.lax.rsqrt(var2 + eps)
        yn = yr * mult2 + (be2 - mean2 * mult2)

        out_ref[...] = yn.reshape(BN, Q, D)                  # carry; HBM flush once at end

    # ---- VMEM budget from the (8,128)-padded footprint (double buffers included) ----
    resident = (2 * _pad_bytes((BN, Q, D))                   # u input (pipeline buffers)
                + 2 * _pad_bytes((BN, Q, D))                 # out buffer = activation carry
                + _pad_bytes((HB, Q, Q)))                    # residual-attention scores
    weights = 2 * (_pad_bytes((D, 3 * D)) + _pad_bytes((D, D)) + _pad_bytes((D, F))
                   + _pad_bytes((F, D)) + _pad_bytes((8, C)))
    interm = (2 * _pad_bytes((BN * Q, 3 * D)) + 3 * _pad_bytes((HB, Q, dk))
              + 3 * _pad_bytes((HB, Q, Q)) + 2 * _pad_bytes((BN * Q, F))
              + 6 * _pad_bytes((BN * Q, D)))
    est = int(1.25 * (resident + weights + interm))
    # 56 MiB fits every generation (v7x has 64 MiB physical); if est exceeds it, the
    # TODO(synk) BN-tiling above is the correct fix, not a tighter clamp.
    vmem_limit = min(max(est, 32 * 1024 * 1024), 56 * 1024 * 1024)

    in_specs = [
        pl.BlockSpec((BN, Q, D), lambda l: (0, 0, 0)),        # u (fetched once, resident)
        pl.BlockSpec((1, D, 3 * D), lambda l: (l, 0, 0)),     # W_qkv  (streamed per layer)
        pl.BlockSpec((1, D, D), lambda l: (l, 0, 0)),         # W_O
        pl.BlockSpec((1, D, F), lambda l: (l, 0, 0)),         # W_1
        pl.BlockSpec((1, F, D), lambda l: (l, 0, 0)),         # W_2
        pl.BlockSpec((1, 8, C), lambda l: (l, 0, 0)),         # packed biases / BN affine
    ]

    grid_spec = pltpu.PrefetchScalarGridSpec(
        num_scalar_prefetch=0,
        grid=(n_layers,),
        in_specs=in_specs,
        out_specs=pl.BlockSpec((BN, Q, D), lambda l: (0, 0, 0)),
        scratch_shapes=[
            pltpu.VMEM((HB, Q, Q), jnp.float32),              # residual attention scores
        ],
    )

    return pl.pallas_call(
        kernel,
        out_shape=jax.ShapeDtypeStruct((BN, Q, D), jnp.float32),
        grid_spec=grid_spec,
        compiler_params=pltpu.CompilerParams(
            dimension_semantics=("arbitrary",),               # layer chain is sequential
            vmem_limit_bytes=vmem_limit,
        ),
    )


# ---------------------------------------------------------------------------
# Full TSTiEncoder forward (layout glue in plain JAX, compute in Pallas)
# ---------------------------------------------------------------------------
def tsti_encoder_forward(x, params, n_heads):
    bs, n_vars, patch_len, patch_num = x.shape
    # x.permute(0, 1, 3, 2) -> [bs, n_vars, patch_num, patch_len] -> [BN, Q, P]
    xp = jnp.transpose(x, (0, 1, 3, 2)).reshape(bs * n_vars, patch_num, patch_len)

    W_P, b_P, W_pos = params['W_P'], params['b_P'], params['W_pos']
    BN, Q, P = xp.shape
    D = W_P.shape[1]
    H = n_heads
    F = params['layers'][0][10].shape[1]
    L = len(params['layers'])

    # 1) patch embedding (tiny separate kernel; dropout p=0)
    u = _make_embed(BN, Q, P, D)(xp, W_P, b_P, W_pos)

    # 2) stack per-layer weights; pack the eight small vectors into one [L, 8, C] array
    lys = params['layers']
    wqkv = jnp.stack([jnp.concatenate([lp[0], lp[2], lp[4]], axis=1) for lp in lys])  # [L,D,3D]
    wo = jnp.stack([lp[6] for lp in lys])                                             # [L,D,D]
    w1 = jnp.stack([lp[10] for lp in lys])                                            # [L,D,F]
    w2 = jnp.stack([lp[12] for lp in lys])                                            # [L,F,D]

    C = max(3 * D, F)

    def pad_row(v):
        v = v.reshape(1, -1)
        return jnp.pad(v, ((0, 0), (0, C - v.shape[1])))

    vecs = jnp.stack([
        jnp.concatenate([
            pad_row(jnp.concatenate([lp[1], lp[3], lp[5]], axis=1)),  # b_qkv  [1,3D]
            pad_row(lp[7]),    # b_O
            pad_row(lp[8]),    # gamma1
            pad_row(lp[9]),    # beta1
            pad_row(lp[11]),   # b_1    [1,F]
            pad_row(lp[13]),   # b_2
            pad_row(lp[14]),   # gamma2
            pad_row(lp[15]),   # beta2
        ], axis=0)
        for lp in lys])                                               # [L, 8, C]

    fused = _make_fused_encoder(BN, Q, D, F, H, L, C)
    z = fused(u, wqkv, wo, w1, w2, vecs)

    z = z.reshape(bs, n_vars, Q, D)
    return jnp.transpose(z, (0, 1, 3, 2))                    # [bs, n_vars, d_model, patch_num]


# ---------------------------------------------------------------------------
# Deterministic synthetic parameters (shapes from the module's __init__)
# ---------------------------------------------------------------------------
def init_params(key, patch_len, patch_num, d_model, d_ff, n_layers):
    def linear(k, fan_in, fan_out):
        kw, kb = jax.random.split(k)
        bound = 1.0 / math.sqrt(fan_in)
        w = jax.random.uniform(kw, (fan_in, fan_out), jnp.float32, -bound, bound)
        b = jax.random.uniform(kb, (1, fan_out), jnp.float32, -bound, bound)
        return w, b

    keys = jax.random.split(key, 2 + n_layers)
    W_P, b_P = linear(keys[0], patch_len, d_model)
    W_pos = jax.random.uniform(keys[1], (patch_num, 1), jnp.float32, -0.02, 0.02)

    layers = []
    for i in range(n_layers):
        ks = jax.random.split(keys[2 + i], 6)
        wq, bq = linear(ks[0], d_model, d_model)
        wk, bk = linear(ks[1], d_model, d_model)
        wv, bv = linear(ks[2], d_model, d_model)
        wo, bo = linear(ks[3], d_model, d_model)
        w1, b1 = linear(ks[4], d_model, d_ff)
        w2, b2 = linear(ks[5], d_ff, d_model)
        g1 = jnp.ones((1, d_model), jnp.float32)
        be1 = jnp.zeros((1, d_model), jnp.float32)
        g2 = jnp.ones((1, d_model), jnp.float32)
        be2 = jnp.zeros((1, d_model), jnp.float32)
        layers.append((wq, bq, wk, bk, wv, bv, wo, bo,
                       g1, be1, w1, b1, w2, b2, g2, be2))
    return dict(W_P=W_P, b_P=b_P, W_pos=W_pos, layers=layers)


if __name__ == "__main__":
    # x: [bs, n_vars(c_in), patch_len, patch_num]
    bs, n_vars, patch_len, patch_num = 2, 4, 16, 8
    d_model, n_heads, d_ff, n_layers = 32, 4, 64, 2

    key = jax.random.PRNGKey(0)
    kx, kp = jax.random.split(key)
    x = jax.random.normal(kx, (bs, n_vars, patch_len, patch_num), jnp.float32)
    params = init_params(kp, patch_len, patch_num, d_model, d_ff, n_layers)

    z = tsti_encoder_forward(x, params, n_heads=n_heads)
    z = jax.block_until_ready(z)

    assert z.shape == (bs, n_vars, d_model, patch_num), z.shape
    assert bool(jnp.all(jnp.isfinite(z)))
    print("KERNEL_OK")
</pallas_src>

<mosaic_0001>
module attributes {stable_mosaic.version = 11 : i64} {
  func.func @kernel(%arg0: memref<8x8x16xf32, #tpu.memory_space<vmem>>, %arg1: memref<16x32xf32, #tpu.memory_space<vmem>>, %arg2: memref<1x32xf32, #tpu.memory_space<vmem>>, %arg3: memref<8x1xf32, #tpu.memory_space<vmem>>, %arg4: memref<8x8x32xf32, #tpu.memory_space<vmem>>) attributes {dimension_semantics = [], scalar_prefetch = 0 : i64, scratch_operands = 0 : i64, tpu.core_type = #tpu.core_type<tc>} {
    %c0 = arith.constant 0 : index
    %c0_0 = arith.constant 0 : index
    %c0_1 = arith.constant 0 : index
    %0 = vector.load %arg0[%c0, %c0_0, %c0_1] : memref<8x8x16xf32, #tpu.memory_space<vmem>>, vector<8x8x16xf32>
    %1 = vector.shape_cast %0 : vector<8x8x16xf32> to vector<64x16xf32>
    %c0_2 = arith.constant 0 : index
    %c0_3 = arith.constant 0 : index
    %2 = vector.load %arg1[%c0_2, %c0_3] : memref<16x32xf32, #tpu.memory_space<vmem>>, vector<16x32xf32>
    %cst = arith.constant dense<0.000000e+00> : vector<64x32xf32>
    %3 = tpu.matmul %1, %2, %cst {dimension_numbers = #tpu.dot_dimension_numbers<[1], [0], [0], [1], [0, 0, 1, 1], [], []>} : vector<64x16xf32>, vector<16x32xf32>, vector<64x32xf32> -> vector<64x32xf32>
    %c0_4 = arith.constant 0 : index
    %c0_5 = arith.constant 0 : index
    %4 = vector.load %arg2[%c0_4, %c0_5] : memref<1x32xf32, #tpu.memory_space<vmem>>, vector<1x32xf32>
    %5 = vector.broadcast %4 : vector<1x32xf32> to vector<64x32xf32>
    %6 = arith.addf %3, %5 : vector<64x32xf32>
    %7 = vector.shape_cast %6 : vector<64x32xf32> to vector<8x8x32xf32>
    %c0_6 = arith.constant 0 : index
    %c0_7 = arith.constant 0 : index
    %8 = vector.load %arg3[%c0_6, %c0_7] : memref<8x1xf32, #tpu.memory_space<vmem>>, vector<8x1xf32>
    %9 = vector.shape_cast %8 : vector<8x1xf32> to vector<1x8x1xf32>
    %10 = vector.broadcast %9 : vector<1x8x1xf32> to vector<8x8x32xf32>
    %11 = arith.addf %7, %10 : vector<8x8x32xf32>
    %c0_8 = arith.constant 0 : index
    %c0_9 = arith.constant 0 : index
    %c0_10 = arith.constant 0 : index
    %12 = vector.load %arg4[%c0_8, %c0_9, %c0_10] : memref<8x8x32xf32, #tpu.memory_space<vmem>>, vector<8x8x32xf32>
    tpu.vector_store %arg4[%c0_8, %c0_9, %c0_10], %11 {strides = array<i32>} : memref<8x8x32xf32, #tpu.memory_space<vmem>>, vector<8x8x32xf32>,
    return
  }
}

</mosaic_0001>

<llo_original>
// kernel: tpu_custom_call.1
$region0: #{tpu_custom_call.1}
  #allocation0 [shape = 'u32[]', space=smem, size = 0x4, offset = 0x4, fixed_abs, tag = 'smem constant byte address 0x4 - core index']
  #allocation1 [shape = 'u32[144,128]{1,0:T(1,128)}', space=vmem, size = 0x12000, scoped, tag = 'internal scratch']
  %s0 = inlined_call_operand.hbm [shape: f32[8,8,16], index: 0, kind: input, shape index: {}]
  %s1 = inlined_call_operand.hbm [shape: f32[16,32], index: 1, kind: input, shape index: {}]
  %s2 = inlined_call_operand.vmem [shape: f32[1,32], index: 2, kind: input, shape index: {}]
  %s3 = inlined_call_operand.vmem [shape: f32[8,1], index: 3, kind: input, shape index: {}]
  %s4 = inlined_call_operand.hbm [shape: f32[8,8,32], index: 4, kind: output, shape index: {}]
  %s5 = sld [smem:[#allocation0]]
  $region34: #{tpu_custom_call.1} parent=0
    _
  %s7 = ssub.s32 1, %s5
  %s8 = scalar_select 0, %s7, %s5
  $region1: #{tpu_custom_call.1} parent=0
    #allocation2 [shape = 'u8[32768]{0}', space=vmem, size = 0x8000, scoped, tag = 'input window, operand 0, single buffered']
    #allocation3 [shape = 's32[1]{0}', space=sflag, size = 0x4, scoped, tag = 'scoped memory for tpu_custom_call.1']
    #allocation4 [shape = 's32[1]{0}', space=sflag, size = 0x4, scoped, tag = 'scoped memory for tpu_custom_call.1']
    #allocation5 [shape = 'u8[8192]{0}', space=vmem, size = 0x2000, scoped, tag = 'input window, operand 1, single buffered']
    #allocation6 [shape = 's32[1]{0}', space=sflag, size = 0x4, scoped, tag = 'scoped memory for tpu_custom_call.1']
    #allocation7 [shape = 'u8[32768]{0}', space=vmem, size = 0x8000, scoped, tag = 'output window, operand 0, single buffered']
    %9 = vsyncpa [#allocation3], 0
    %10 = vsyncpa [#allocation6], 0
    %11 = vsyncpa [#allocation4], 0
    // Predicated region
    $region2: #{tpu_custom_call.1} parent=1 // pred_check
      _
    $region3: #{tpu_custom_call.1} parent=1 // pred_check_branch
      %13 = sbr.rel (0) target = $region5
    $region4: #{tpu_custom_call.1} parent=1 // pred_region
      %s15 = ssub.s32 1024, 1024
      %16 = vsyncadd [#allocation3], %s15
      %s17 = sshll.u32 [#allocation2], 4
      %s18 = int_to_ptr.vmem [resolvable:$true] %s17
      %23 = dma.hbm_to_vmem [thread:$0]  %s0, 1024, %s18, [#allocation3], 128, 128, 8
    $region5: #{tpu_custom_call.1} parent=1 // pred_fallthru
      _
    // Predicated region
    $region6: #{tpu_custom_call.1} parent=1 // pred_check
      _
    $region7: #{tpu_custom_call.1} parent=1 // pred_check_branch
      %25 = sbr.rel (0) target = $region9
    $region8: #{tpu_custom_call.1} parent=1 // pred_region
      %s27 = ssub.s32 256, 256
      %28 = vsyncadd [#allocation6], %s27
      %s29 = sshll.u32 [#allocation5], 4
      %s30 = int_to_ptr.vmem [resolvable:$true] %s29
      %35 = dma.hbm_to_vmem [thread:$0]  %s1, 256, %s30, [#allocation6], 128, 128, 8
    $region9: #{tpu_custom_call.1} parent=1 // pred_fallthru
      _
    // Predicated region
    $region10: #{tpu_custom_call.1} parent=1 // pred_check
      _
    $region11: #{tpu_custom_call.1} parent=1 // pred_check_branch
      %37 = sbr.rel (0) target = $region13
    $region12: #{tpu_custom_call.1} parent=1 // pred_region
      _
    $region13: #{tpu_custom_call.1} parent=1 // pred_fallthru
      _
    // Predicated region
    $region14: #{tpu_custom_call.1} parent=1 // pred_check
      _
    $region15: #{tpu_custom_call.1} parent=1 // pred_check_branch
      %39 = sbr.rel (0) target = $region17
    $region16: #{tpu_custom_call.1} parent=1 // pred_region
      _
    $region17: #{tpu_custom_call.1} parent=1 // pred_fallthru
      _
    // Predicated region
    $region18: #{tpu_custom_call.1} parent=1 // pred_check
      _
    $region19: #{tpu_custom_call.1} parent=1 // pred_check_branch
      %41 = sbr.rel (0) target = $region21
    $region20: #{tpu_custom_call.1} parent=1 // pred_region
      %42 = dma.done [#allocation3], 1024
    $region21: #{tpu_custom_call.1} parent=1 // pred_fallthru
      _
    // Predicated region
    $region22: #{tpu_custom_call.1} parent=1 // pred_check
      _
    $region23: #{tpu_custom_call.1} parent=1 // pred_check_branch
      %44 = sbr.rel (0) target = $region25
    $region24: #{tpu_custom_call.1} parent=1 // pred_region
      %45 = dma.done [#allocation6], 256
    $region25: #{tpu_custom_call.1} parent=1 // pred_fallthru
      _
    %v46 = vld [vmem:[#allocation2] sm:$0xff]
    %v47 = vld [vmem:[#allocation2 + $0x8] sm:$0xff]
    %v48 = vld [vmem:[#allocation2 + $0x10] sm:$0xff]
    %v49 = vld [vmem:[#allocation2 + $0x18] sm:$0xff]
    %v50 = vld [vmem:[#allocation2 + $0x20] sm:$0xff]
    %v51 = vld [vmem:[#allocation2 + $0x28] sm:$0xff]
    %v52 = vld [vmem:[#allocation2 + $0x30] sm:$0xff]
    %v53 = vld [vmem:[#allocation2 + $0x38] sm:$0xff]
    %v54 = vld [vmem:[#allocation5] sm:$0xff]
    %v55 = vld [vmem:[#allocation5 + $0x8] sm:$0xff]
    %v56 = vld [vmem:[%s2] sm:$0x1]
    %v58 = vlaneseq
    %v59 = vshrl.u32 %v58, 7
    %v60 = vsub.s32 0, %v59
    %v61 = vrot.slane %v56, %v60
    %vm63 = vcmask 130048
    %v65 = vsel %vm63, %v46, 0
    %v68 = vsel %vm63, %v47, 0
    %v71 = vsel %vm63, %v48, 0
    %v74 = vsel %vm63, %v49, 0
    %v77 = vsel %vm63, %v50, 0
    %v80 = vsel %vm63, %v51, 0
    %v83 = vsel %vm63, %v52, 0
    %v86 = vsel %vm63, %v53, 0
    %88 = vmatprep.subr.mxu0 0.0
    %89 = vmatpush1.msra.mxu0 0.0
    %90 = vmatprep.subr.mxu0 0.0
    %91 = vmatpush1.msra.mxu0 0.0
    %92 = vmatprep.subr.mxu0 0.0
    %93 = vmatpush1.msra.mxu0 0.0
    %94 = vmatprep.subr.mxu0 0.0
    %95 = vmatpush1.msra.mxu0 0.0
    %96 = vmatprep.subr.mxu0 0.0
    %97 = vmatpush1.msra.mxu0 0.0
    %98 = vmatprep.subr.mxu0 0.0
    %99 = vmatpush1.msra.mxu0 0.0
    %100 = vmatprep.subr.mxu0 0.0
    %101 = vmatpush1.msra.mxu0 0.0
    %102 = vmatprep.subr.mxu0 0.0
    %103 = vmatpush1.msra.mxu0 0.0
    %104 = vmatprep.subr.mxu0 0.0
    %105 = vmatpush1.msra.mxu0 0.0
    %106 = vmatprep.subr.mxu0 0.0
    %107 = vmatpush1.msra.mxu0 0.0
    %108 = vmatprep.subr.mxu0 0.0
    %109 = vmatpush1.msra.mxu0 0.0
    %110 = vmatprep.subr.mxu0 0.0
    %111 = vmatpush1.msra.mxu0 0.0
    %112 = vmatprep.subr.mxu0 0.0
    %113 = vmatpush1.msra.mxu0 0.0
    %114 = vmatprep.subr.mxu0 0.0
    %115 = vmatpush1.msra.mxu0 0.0
    %116 = vmatprep.subr.mxu0 0.0
    %117 = vmatpush1.msra.mxu0 %v55
    %118 = vmatprep.subr.mxu0 0.0
    %119 = vmatpush1.msra.mxu0 %v54
    %120 = vmatprep.subr.mxu0 0.0
    %121 = vmatpush2.msra.mxu0 0.0
    %122 = vmatprep.subr.mxu0 0.0
    %123 = vmatpush2.msra.mxu0 0.0
    %124 = vmatprep.subr.mxu0 0.0
    %125 = vmatpush2.msra.mxu0 0.0
    %126 = vmatprep.subr.mxu0 0.0
    %127 = vmatpush2.msra.mxu0 0.0
    %128 = vmatprep.subr.mxu0 0.0
    %129 = vmatpush2.msra.mxu0 0.0
    %130 = vmatprep.subr.mxu0 0.0
    %131 = vmatpush2.msra.mxu0 0.0
    %132 = vmatprep.subr.mxu0 0.0
    %133 = vmatpush2.msra.mxu0 0.0
    %134 = vmatprep.subr.mxu0 0.0
    %135 = vmatpush2.msra.mxu0 0.0
    %136 = vmatprep.subr.mxu0 0.0
    %137 = vmatpush2.msra.mxu0 0.0
    %138 = vmatprep.subr.mxu0 0.0
    %139 = vmatpush2.msra.mxu0 0.0
    %140 = vmatprep.subr.mxu0 0.0
    %141 = vmatpush2.msra.mxu0 0.0
    %142 = vmatprep.subr.mxu0 0.0
    %143 = vmatpush2.msra.mxu0 0.0
    %144 = vmatprep.subr.mxu0 0.0
    %145 = vmatpush2.msra.mxu0 0.0
    %146 = vmatprep.subr.mxu0 0.0
    %147 = vmatpush2.msra.mxu0 0.0
    %148 = vmatprep.subr.mxu0 0.0
    %149 = vmatpush2.msra.mxu0 0.0
    %150 = vmatprep.subr.mxu0 0.0
    %151 = vmatpush2.msra.mxu0 0.0
    %152 = vmatprep.mubr.f32.mxu0 0.0
    %153 = vmatmul.mubr.f32.gmra.mxu0 %v65
    %v154 = vpop.f32.mrf.mxu0
    %v155 = vadd.f32 %v61, %v154
    %v156 = vpop.f32.mrf.mxu0
    %157 = vmatprep.mubr.f32.mxu0 0.0
    %158 = vmatmul.mubr.f32.gmra.mxu0 %v68
    %v159 = vpop.f32.mrf.mxu0
    %v160 = vadd.f32 %v61, %v159
    %v161 = vpop.f32.mrf.mxu0
    %162 = vmatprep.mubr.f32.mxu0 0.0
    %163 = vmatmul.mubr.f32.gmra.mxu0 %v71
    %v164 = vpop.f32.mrf.mxu0
    %v165 = vadd.f32 %v61, %v164
    %v166 = vpop.f32.mrf.mxu0
    %167 = vmatprep.mubr.f32.mxu0 0.0
    %168 = vmatmul.mubr.f32.gmra.mxu0 %v74
    %v169 = vpop.f32.mrf.mxu0
    %v170 = vadd.f32 %v61, %v169
    %v171 = vpop.f32.mrf.mxu0
    %172 = vmatprep.mubr.f32.mxu0 0.0
    %173 = vmatmul.mubr.f32.gmra.mxu0 %v77
    %v174 = vpop.f32.mrf.mxu0
    %v175 = vadd.f32 %v61, %v174
    %v176 = vpop.f32.mrf.mxu0
    %177 = vmatprep.mubr.f32.mxu0 0.0
    %178 = vmatmul.mubr.f32.gmra.mxu0 %v80
    %v179 = vpop.f32.mrf.mxu0
    %v180 = vadd.f32 %v61, %v179
    %v181 = vpop.f32.mrf.mxu0
    %182 = vmatprep.mubr.f32.mxu0 0.0
    %183 = vmatmul.mubr.f32.gmra.mxu0 %v83
    %v184 = vpop.f32.mrf.mxu0
    %v185 = vadd.f32 %v61, %v184
    %v186 = vpop.f32.mrf.mxu0
    %187 = vmatprep.mubr.f32.mxu0 0.0
    %188 = vmatmul.mubr.f32.gmra.mxu0 %v86
    %v189 = vpop.f32.mrf.mxu0
    %v190 = vadd.f32 %v61, %v189
    %v191 = vpop.f32.mrf.mxu0
    %192 = vdwg.mxu0
    %v193 = vld [vmem:[%s3] sm:$0xff]
    %195 = vset.pattern.permute.xlu0 0
    %196 = vperm.xlu0 %195, %v193
    %v197 = vpop.permute.xlu0 %196
    %v199 = vadd.f32 %v155, %v197
    %v200 = vadd.f32 %v160, %v197
    %v201 = vadd.f32 %v165, %v197
    %v202 = vadd.f32 %v170, %v197
    %v203 = vadd.f32 %v175, %v197
    %v204 = vadd.f32 %v180, %v197
    %v205 = vadd.f32 %v185, %v197
    %v206 = vadd.f32 %v190, %v197
    %vm207 = vcmask 261120
    %208 = vst.msk [vmem:[#allocation7] sm:$0xff] %vm207, %v199
    %209 = vst.msk [vmem:[#allocation7 + $0x8] sm:$0xff] %vm207, %v200
    %210 = vst.msk [vmem:[#allocation7 + $0x10] sm:$0xff] %vm207, %v201
    %211 = vst.msk [vmem:[#allocation7 + $0x18] sm:$0xff] %vm207, %v202
    %212 = vst.msk [vmem:[#allocation7 + $0x20] sm:$0xff] %vm207, %v203
    %213 = vst.msk [vmem:[#allocation7 + $0x28] sm:$0xff] %vm207, %v204
    %214 = vst.msk [vmem:[#allocation7 + $0x30] sm:$0xff] %vm207, %v205
    %215 = vst.msk [vmem:[#allocation7 + $0x38] sm:$0xff] %vm207, %v206
    // Predicated region
    $region26: #{tpu_custom_call.1} parent=1 // pred_check
      _
    $region27: #{tpu_custom_call.1} parent=1 // pred_check_branch
      %217 = sbr.rel (0) target = $region29
    $region28: #{tpu_custom_call.1} parent=1 // pred_region
      %s219 = ssub.s32 1024, 1024
      %220 = vsyncadd [#allocation4], %s219
      %s221 = sshll.u32 [#allocation7], 4
      %s222 = int_to_ptr.vmem [resolvable:$true] %s221
      %227 = dma.vmem_to_hbm [thread:$0]  %s222, 1024, %s4, [#allocation4], 128, 128, 8
    $region29: #{tpu_custom_call.1} parent=1 // pred_fallthru
      _
    // Predicated region
    $region30: #{tpu_custom_call.1} parent=1 // pred_check
      _
    $region31: #{tpu_custom_call.1} parent=1 // pred_check_branch
      %229 = sbr.rel (0) target = $region33
    $region32: #{tpu_custom_call.1} parent=1 // pred_region
      %230 = dma.done [#allocation4], 1024
    $region33: #{tpu_custom_call.1} parent=1 // pred_fallthru
      _
    %231 = vsyncpa [#allocation3], 1
    %232 = vsyncpa [#allocation6], 1
    %233 = vsyncpa [#allocation4], 1

</llo_original>
